<compile_context>
chip_gen: v7x
topology: tpu7x:2x2x1
jax: 0.10.0
libtpu: 0.0.40
codegen_flags: <defaults>
</compile_context>

<pallas_src>
import functools

import jax
import jax.numpy as jnp
from jax.experimental import pallas as pl
from jax.experimental.pallas import tpu as pltpu

_NEG_BIG = -1e30  # finite "minus infinity" for dead label lanes (no NaN risk)
_VMEM_LIMIT = 32 * 1024 * 1024


def _round_up(x, m):
    return ((x + m - 1) // m) * m


def _pick_batch_tiling(B, max_tile=256):
    """Batch tile <= 256 rows, minimal padding, >=2 grid steps when B >= 16."""
    nb = pl.cdiv(B, max_tile)
    if B >= 16:
        nb = max(nb, 2)  # let v7x's two TensorCores both get a batch block
    TB = _round_up(pl.cdiv(B, nb), 8)
    B_pad = TB * nb
    return TB, B_pad, nb


def _pick_label_tile(L_pad, max_tile=512):
    for tl in (512, 256, 128):
        if tl <= max_tile and L_pad % tl == 0:
            return tl
    return 128  # unreachable: L_pad is always a multiple of 128


# ----------------------------------------------------------------------------
# Kernel 1: linear projection  logits = x @ W + b        (extract_features)
# ----------------------------------------------------------------------------
def _linear_kernel(x_ref, w_ref, b_ref, out_ref):
    # x_ref: (TB, H) bf16, w_ref: (H, TL) bf16, b_ref: (1, TL) f32
    acc = jnp.dot(x_ref[...], w_ref[...], preferred_element_type=jnp.float32)
    out_ref[...] = (acc + b_ref[...]).astype(out_ref.dtype)


def linear_pallas(x, w_p, b_p, num_labels):
    B, H = x.shape
    _, L_pad = w_p.shape
    TB, B_pad, nb = _pick_batch_tiling(B)
    TL = _pick_label_tile(L_pad)
    nl = L_pad // TL

    x_bf = x.astype(jnp.bfloat16)
    if B_pad != B:
        x_bf = jnp.pad(x_bf, ((0, B_pad - B), (0, 0)))

    out = pl.pallas_call(
        _linear_kernel,
        out_shape=jax.ShapeDtypeStruct((B_pad, L_pad), jnp.float32),
        grid_spec=pltpu.PrefetchScalarGridSpec(
            num_scalar_prefetch=0,
            grid=(nb, nl),
            in_specs=[
                pl.BlockSpec((TB, H), lambda i, l: (i, 0)),
                pl.BlockSpec((H, TL), lambda i, l: (0, l)),
                pl.BlockSpec((1, TL), lambda i, l: (0, l)),
            ],
            out_specs=pl.BlockSpec((TB, TL), lambda i, l: (i, l)),
        ),
        compiler_params=pltpu.CompilerParams(
            dimension_semantics=("parallel", "parallel"),
            vmem_limit_bytes=_VMEM_LIMIT,
        ),
    )(x_bf, w_p, b_p)
    return out[:B, :num_labels]


# ----------------------------------------------------------------------------
# Kernel 2: softmax / log_softmax along dim=-1           (get_normalized_probs)
# Two-pass over label tiles: phase 0 accumulates running max/sum in VMEM
# scratch, phase 1 re-reads each logits tile and writes the normalized tile.
# ----------------------------------------------------------------------------
def _normalize_kernel(logits_ref, out_ref, m_sc, l_sc, *, log_probs,
                      approx_recip):
    phase = pl.program_id(1)
    lt = pl.program_id(2)

    @pl.when((phase == 0) & (lt == 0))
    def _():
        m_sc[...] = jnp.full_like(m_sc, -jnp.inf)
        l_sc[...] = jnp.zeros_like(l_sc)

    z = logits_ref[...].astype(jnp.float32)

    @pl.when(phase == 0)
    def _():
        m_prev = m_sc[...]
        m_new = jnp.maximum(m_prev, jnp.max(z, axis=-1, keepdims=True))
        l_sc[...] = (l_sc[...] * jnp.exp(m_prev - m_new)
                     + jnp.sum(jnp.exp(z - m_new), axis=-1, keepdims=True))
        m_sc[...] = m_new

    @pl.when(phase == 1)
    def _():
        shifted = z - m_sc[...]
        if log_probs:
            out_ref[...] = (shifted - jnp.log(l_sc[...])).astype(out_ref.dtype)
        else:
            inv = (pl.reciprocal(l_sc[...], approx=True) if approx_recip
                   else 1.0 / l_sc[...])
            out_ref[...] = (jnp.exp(shifted) * inv).astype(out_ref.dtype)


def normalized_probs_pallas(logits, log_probs, out_dtype=jnp.float32,
                            approx_recip=True):
    B, L = logits.shape
    L_pad = _round_up(L, 128)
    TB, B_pad, nb = _pick_batch_tiling(B)
    TL = _pick_label_tile(L_pad)
    nl = L_pad // TL

    logits_p = logits
    if B_pad != B or L_pad != L:
        # Dead lanes / rows get a large negative value -> exp underflows to 0,
        # no iota mask needed inside the kernel and no NaN anywhere.
        logits_p = jnp.pad(logits, ((0, B_pad - B), (0, L_pad - L)),
                           constant_values=_NEG_BIG)

    kernel = functools.partial(_normalize_kernel, log_probs=log_probs,
                               approx_recip=approx_recip)
    out = pl.pallas_call(
        kernel,
        out_shape=jax.ShapeDtypeStruct((B_pad, L_pad), out_dtype),
        grid_spec=pltpu.PrefetchScalarGridSpec(
            num_scalar_prefetch=0,
            grid=(nb, 2, nl),
            in_specs=[pl.BlockSpec((TB, TL), lambda i, p, l: (i, l))],
            # During phase 0 the output block index is pinned to (i, 0) so no
            # unwritten block is ever written back; phase 1 writes (i, l).
            out_specs=pl.BlockSpec((TB, TL), lambda i, p, l: (i, p * l)),
            scratch_shapes=[pltpu.VMEM((TB, 1), jnp.float32),
                            pltpu.VMEM((TB, 1), jnp.float32)],
        ),
        compiler_params=pltpu.CompilerParams(
            dimension_semantics=("parallel", "arbitrary", "arbitrary"),
            vmem_limit_bytes=_VMEM_LIMIT,
        ),
    )(logits_p)
    return out[:B, :L]


# ----------------------------------------------------------------------------
# Kernel 3: fused linear + normalize (no logits HBM round-trip, probs only)
# Phase 0: x @ W_l + b_l per label tile, accumulate running max/sum.
# Phase 1: recompute the tile (cheap MXU work) and write normalized output.
# ----------------------------------------------------------------------------
def _fused_kernel(x_ref, w_ref, b_ref, out_ref, m_sc, l_sc, *, log_probs,
                  approx_recip):
    phase = pl.program_id(1)
    lt = pl.program_id(2)

    @pl.when((phase == 0) & (lt == 0))
    def _():
        m_sc[...] = jnp.full_like(m_sc, -jnp.inf)
        l_sc[...] = jnp.zeros_like(l_sc)

    # bf16 operands, f32 accumulation; dead label lanes get bias = -1e30.
    z = (jnp.dot(x_ref[...], w_ref[...], preferred_element_type=jnp.float32)
         + b_ref[...])

    @pl.when(phase == 0)
    def _():
        m_prev = m_sc[...]
        m_new = jnp.maximum(m_prev, jnp.max(z, axis=-1, keepdims=True))
        l_sc[...] = (l_sc[...] * jnp.exp(m_prev - m_new)
                     + jnp.sum(jnp.exp(z - m_new), axis=-1, keepdims=True))
        m_sc[...] = m_new

    @pl.when(phase == 1)
    def _():
        shifted = z - m_sc[...]
        if log_probs:
            out_ref[...] = (shifted - jnp.log(l_sc[...])).astype(out_ref.dtype)
        else:
            inv = (pl.reciprocal(l_sc[...], approx=True) if approx_recip
                   else 1.0 / l_sc[...])
            out_ref[...] = (jnp.exp(shifted) * inv).astype(out_ref.dtype)


def fused_linear_normalized_pallas(x, w_p, b_p, num_labels, log_probs,
                                   out_dtype=jnp.float32, approx_recip=True):
    B, H = x.shape
    _, L_pad = w_p.shape
    TB, B_pad, nb = _pick_batch_tiling(B)
    TL = _pick_label_tile(L_pad)
    nl = L_pad // TL

    x_bf = x.astype(jnp.bfloat16)
    if B_pad != B:
        x_bf = jnp.pad(x_bf, ((0, B_pad - B), (0, 0)))

    kernel = functools.partial(_fused_kernel, log_probs=log_probs,
                               approx_recip=approx_recip)
    out = pl.pallas_call(
        kernel,
        out_shape=jax.ShapeDtypeStruct((B_pad, L_pad), out_dtype),
        grid_spec=pltpu.PrefetchScalarGridSpec(
            num_scalar_prefetch=0,
            grid=(nb, 2, nl),
            in_specs=[
                pl.BlockSpec((TB, H), lambda i, p, l: (i, 0)),   # resident
                pl.BlockSpec((H, TL), lambda i, p, l: (0, l)),
                pl.BlockSpec((1, TL), lambda i, p, l: (0, l)),
            ],
            out_specs=pl.BlockSpec((TB, TL), lambda i, p, l: (i, p * l)),
            scratch_shapes=[pltpu.VMEM((TB, 1), jnp.float32),
                            pltpu.VMEM((TB, 1), jnp.float32)],
        ),
        compiler_params=pltpu.CompilerParams(
            dimension_semantics=("parallel", "arbitrary", "arbitrary"),
            vmem_limit_bytes=_VMEM_LIMIT,
        ),
    )(x_bf, w_p, b_p)
    return out[:B, :num_labels]


# ----------------------------------------------------------------------------
# Module wrapper mirroring the PyTorch class
# ----------------------------------------------------------------------------
class FairseqDecoderLabel:
    """Base class for decoders (JAX/Pallas port)."""

    def __init__(self, hidden_dim, num_labels, key):
        self.onnx_trace = False
        self.adaptive_softmax = None
        self.hidden_dim = hidden_dim
        self.num_labels = num_labels
        kw, kb = jax.random.split(key)
        # f32 masters (reference / checkpointing).
        self.weight = jax.random.normal(
            kw, (hidden_dim, num_labels), dtype=jnp.float32) * 0.02
        self.bias = jax.random.normal(
            kb, (num_labels,), dtype=jnp.float32) * 0.01
        # Padded, kernel-ready copies built once:
        #   * W in bf16 (MXU-native), label axis padded to 128 with zeros.
        #   * bias in f32, dead label lanes = -1e30 (static softmax mask).
        L_pad = _round_up(num_labels, 128)
        self.weight_p = (jnp.zeros((hidden_dim, L_pad), jnp.bfloat16)
                         .at[:, :num_labels].set(self.weight.astype(jnp.bfloat16)))
        self.bias_p = (jnp.full((1, L_pad), _NEG_BIG, jnp.float32)
                       .at[0, :num_labels].set(self.bias))

    def forward(self, encoder_out=None):
        """Returns the decoder's output of shape (batch, labels)."""
        return self.extract_features(encoder_out=encoder_out)

    def extract_features(self, encoder_out=None):
        """Returns features of shape (batch, labels)."""
        feats = encoder_out["encoder_out"]  # (batch, hidden)
        return linear_pallas(feats, self.weight_p, self.bias_p, self.num_labels)

    def get_normalized_probs(self, net_output, log_probs, sample=None):
        """Get normalized probabilities (or log probs) from net output."""
        # adaptive_softmax is always None in this synthetic setup.
        logits = net_output[1]
        return normalized_probs_pallas(logits, log_probs)

    def forward_normalized(self, encoder_out, log_probs):
        """Recommended fused path: normalized probs in a single pallas_call
        (no logits slab is written back to HBM)."""
        feats = encoder_out["encoder_out"]
        return fused_linear_normalized_pallas(
            feats, self.weight_p, self.bias_p, self.num_labels, log_probs)

    def prepare_for_onnx_export_(self):
        self.onnx_trace = True


# ----------------------------------------------------------------------------
# Main
# ----------------------------------------------------------------------------
if __name__ == "__main__":
    key = jax.random.PRNGKey(0)
    k_feat, k_param = jax.random.split(key)

    batch, hidden, labels = 8, 32, 16
    encoder_feats = jax.random.normal(k_feat, (batch, hidden), dtype=jnp.float32)
    encoder_out = {"encoder_out": encoder_feats}

    decoder = FairseqDecoderLabel(hidden_dim=hidden, num_labels=labels, key=k_param)

    # forward: (batch, labels) logits
    logits = jax.block_until_ready(decoder.forward(encoder_out=encoder_out))

    # get_normalized_probs on an (extra, logits) net_output tuple
    log_p = jax.block_until_ready(
        decoder.get_normalized_probs((None, logits), log_probs=True))
    probs = jax.block_until_ready(
        decoder.get_normalized_probs((None, logits), log_probs=False))

    # fused path (probs-only, no logits writeback)
    f_probs = jax.block_until_ready(
        decoder.forward_normalized(encoder_out, log_probs=False))
    f_logp = jax.block_until_ready(
        decoder.forward_normalized(encoder_out, log_probs=True))

    # Correctness checks.  The kernel feeds the MXU bf16 operands (f32
    # accumulation), so the tight reference uses the same operand cast; a
    # looser check against the pure-f32 reference bounds the bf16 error.
    x_bf = encoder_feats.astype(jnp.bfloat16)
    w_bf = decoder.weight.astype(jnp.bfloat16)
    ref_logits = jnp.dot(x_bf, w_bf,
                         preferred_element_type=jnp.float32) + decoder.bias
    ref_logits_f32 = encoder_feats @ decoder.weight + decoder.bias
    ref_log_p = jax.nn.log_softmax(ref_logits, axis=-1)
    ref_probs = jax.nn.softmax(ref_logits, axis=-1)

    assert logits.shape == (batch, labels)
    assert jnp.allclose(logits, ref_logits, atol=1e-4, rtol=1e-4)
    assert jnp.allclose(logits, ref_logits_f32, atol=5e-3, rtol=5e-3)
    assert jnp.allclose(log_p, ref_log_p, atol=1e-4, rtol=1e-4)
    # probs path uses pl.reciprocal(approx=True): ~1e-3 relative error budget.
    assert jnp.allclose(probs, ref_probs, atol=2e-3, rtol=2e-3)
    assert jnp.allclose(jnp.sum(probs, axis=-1), 1.0, atol=5e-3)
    assert f_probs.shape == (batch, labels)
    assert jnp.allclose(f_probs, ref_probs, atol=2e-3, rtol=2e-3)
    assert jnp.allclose(f_logp, ref_log_p, atol=1e-4, rtol=1e-4)
    assert jnp.allclose(jnp.sum(f_probs, axis=-1), 1.0, atol=5e-3)

    print("KERNEL_OK")
</pallas_src>

<mosaic_0001>
module attributes {stable_mosaic.version = 11 : i64} {
  func.func @_linear_kernel(%arg0: i32, %arg1: i32, %arg2: memref<8x32xbf16, #tpu.memory_space<vmem>>, %arg3: memref<32x128xbf16, #tpu.memory_space<vmem>>, %arg4: memref<1x128xf32, #tpu.memory_space<vmem>>, %arg5: memref<8x128xf32, #tpu.memory_space<vmem>>) attributes {dimension_semantics = [#tpu.dimension_semantics<parallel>, #tpu.dimension_semantics<parallel>], iteration_bounds = array<i64: 1, 1>, scalar_prefetch = 0 : i64, scratch_operands = 0 : i64, tpu.core_type = #tpu.core_type<tc>, window_params = [{transform_indices = @transform_0, window_bounds = array<i64: 8, 32>}, {transform_indices = @transform_1, window_bounds = array<i64: 32, 128>}, {transform_indices = @transform_2, window_bounds = array<i64: 1, 128>}, {transform_indices = @transform_3, window_bounds = array<i64: 8, 128>}]} {
    %c0 = arith.constant 0 : index
    %c0_0 = arith.constant 0 : index
    %0 = vector.load %arg2[%c0, %c0_0] : memref<8x32xbf16, #tpu.memory_space<vmem>>, vector<8x32xbf16>
    %c0_1 = arith.constant 0 : index
    %c0_2 = arith.constant 0 : index
    %1 = vector.load %arg3[%c0_1, %c0_2] : memref<32x128xbf16, #tpu.memory_space<vmem>>, vector<32x128xbf16>
    %cst = arith.constant dense<0.000000e+00> : vector<8x128xf32>
    %2 = tpu.matmul %0, %1, %cst {dimension_numbers = #tpu.dot_dimension_numbers<[1], [0], [0], [1], [0, 0, 1, 1], [], []>} : vector<8x32xbf16>, vector<32x128xbf16>, vector<8x128xf32> -> vector<8x128xf32>
    %c0_3 = arith.constant 0 : index
    %c0_4 = arith.constant 0 : index
    %3 = vector.load %arg4[%c0_3, %c0_4] : memref<1x128xf32, #tpu.memory_space<vmem>>, vector<1x128xf32>
    %4 = vector.broadcast %3 : vector<1x128xf32> to vector<8x128xf32>
    %5 = arith.addf %2, %4 : vector<8x128xf32>
    %c0_5 = arith.constant 0 : index
    %c0_6 = arith.constant 0 : index
    %6 = vector.load %arg5[%c0_5, %c0_6] : memref<8x128xf32, #tpu.memory_space<vmem>>, vector<8x128xf32>
    tpu.vector_store %arg5[%c0_5, %c0_6], %5 {strides = array<i32>} : memref<8x128xf32, #tpu.memory_space<vmem>>, vector<8x128xf32>,
    return
  }
  func.func @transform_0(%arg0: i32, %arg1: i32) -> (i32, i32) {
    %c0_i32 = arith.constant 0 : i32
    %c0_i32_0 = arith.constant 0 : i32
    return %arg0, %c0_i32 : i32, i32
  }
  func.func @transform_1(%arg0: i32, %arg1: i32) -> (i32, i32) {
    %c0_i32 = arith.constant 0 : i32
    %c0_i32_0 = arith.constant 0 : i32
    return %c0_i32, %arg1 : i32, i32
  }
  func.func @transform_2(%arg0: i32, %arg1: i32) -> (i32, i32) {
    %c0_i32 = arith.constant 0 : i32
    %c0_i32_0 = arith.constant 0 : i32
    return %c0_i32, %arg1 : i32, i32
  }
  func.func @transform_3(%arg0: i32, %arg1: i32) -> (i32, i32) {
    %c0_i32 = arith.constant 0 : i32
    return %arg0, %arg1 : i32, i32
  }
}

</mosaic_0001>

<llo_original>
// kernel: tpu_custom_call.1
$region0: #{tpu_custom_call.1}
  #allocation0 [shape = 'u32[]', space=smem, size = 0x4, offset = 0x4, fixed_abs, tag = 'smem constant byte address 0x4 - core index']
  #allocation1 [shape = 'u32[144,128]{1,0:T(1,128)}', space=vmem, size = 0x12000, scoped, tag = 'internal scratch']
  %s0 = inlined_call_operand.hbm [shape: bf16[8,32], index: 0, kind: input, shape index: {}]
  %s1 = inlined_call_operand.hbm [shape: bf16[32,128], index: 1, kind: input, shape index: {}]
  %s2 = inlined_call_operand.vmem [shape: f32[1,128], index: 2, kind: input, shape index: {}]
  %s3 = inlined_call_operand.hbm [shape: f32[8,128], index: 3, kind: output, shape index: {}]
  %s4 = sld [smem:[#allocation0]]
  $region30: #{tpu_custom_call.1} parent=0
    _
  %s6 = ssub.s32 1, %s4
  %s7 = scalar_select 0, %s6, %s4
  $region1: #{tpu_custom_call.1} parent=0
    #allocation2 [shape = 'u8[2048]{0}', space=vmem, size = 0x800, scoped, tag = 'input window, operand 0, single buffered']
    #allocation3 [shape = 's32[1]{0}', space=sflag, size = 0x4, scoped, tag = 'scoped memory for tpu_custom_call.1']
    #allocation4 [shape = 's32[1]{0}', space=sflag, size = 0x4, scoped, tag = 'scoped memory for tpu_custom_call.1']
    #allocation5 [shape = 'u8[8192]{0}', space=vmem, size = 0x2000, scoped, tag = 'input window, operand 1, single buffered']
    #allocation6 [shape = 's32[1]{0}', space=sflag, size = 0x4, scoped, tag = 'scoped memory for tpu_custom_call.1']
    #allocation7 [shape = 'u8[4096]{0}', space=vmem, size = 0x1000, scoped, tag = 'output window, operand 0, single buffered']
    %8 = vsyncpa [#allocation3], 0
    %9 = vsyncpa [#allocation6], 0
    %10 = vsyncpa [#allocation4], 0
    // Predicated region
    $region2: #{tpu_custom_call.1} parent=1 // pred_check
      _
    $region3: #{tpu_custom_call.1} parent=1 // pred_check_branch
      %12 = sbr.rel (0) target = $region5
    $region4: #{tpu_custom_call.1} parent=1 // pred_region
      %s14 = ssub.s32 64, 64
      %15 = vsyncadd [#allocation3], %s14
      %s17 = sshll.u32 [#allocation2], 4
      %s18 = int_to_ptr.vmem [resolvable:$true] %s17
      %20 = dma.hbm_to_vmem [thread:$0]  %s0, 64, %s18, [#allocation3]
    $region5: #{tpu_custom_call.1} parent=1 // pred_fallthru
      _
    // Predicated region
    $region6: #{tpu_custom_call.1} parent=1 // pred_check
      _
    $region7: #{tpu_custom_call.1} parent=1 // pred_check_branch
      %22 = sbr.rel (0) target = $region9
    $region8: #{tpu_custom_call.1} parent=1 // pred_region
      %s24 = ssub.s32 256, 256
      %25 = vsyncadd [#allocation6], %s24
      %s26 = sshll.u32 [#allocation5], 4
      %s27 = int_to_ptr.vmem [resolvable:$true] %s26
      %32 = dma.hbm_to_vmem [thread:$0]  %s1, 256, %s27, [#allocation6], 64, 64, 4
    $region9: #{tpu_custom_call.1} parent=1 // pred_fallthru
      _
    // Predicated region
    $region10: #{tpu_custom_call.1} parent=1 // pred_check
      _
    $region11: #{tpu_custom_call.1} parent=1 // pred_check_branch
      %34 = sbr.rel (0) target = $region13
    $region12: #{tpu_custom_call.1} parent=1 // pred_region
      _
    $region13: #{tpu_custom_call.1} parent=1 // pred_fallthru
      _
    // Predicated region
    $region14: #{tpu_custom_call.1} parent=1 // pred_check
      _
    $region15: #{tpu_custom_call.1} parent=1 // pred_check_branch
      %36 = sbr.rel (0) target = $region17
    $region16: #{tpu_custom_call.1} parent=1 // pred_region
      %37 = dma.done [#allocation3], 64
    $region17: #{tpu_custom_call.1} parent=1 // pred_fallthru
      _
    // Predicated region
    $region18: #{tpu_custom_call.1} parent=1 // pred_check
      _
    $region19: #{tpu_custom_call.1} parent=1 // pred_check_branch
      %39 = sbr.rel (0) target = $region21
    $region20: #{tpu_custom_call.1} parent=1 // pred_region
      %40 = dma.done [#allocation6], 256
    $region21: #{tpu_custom_call.1} parent=1 // pred_fallthru
      _
    %v42 = vld [vmem:[#allocation2] sm:$0xf]
    %v43 = vld [vmem:[#allocation5] sm:$0xf]
    %v44 = vld [vmem:[#allocation5 + $0x4] sm:$0xf]
    %v45 = vld [vmem:[#allocation5 + $0x8] sm:$0xf]
    %v46 = vld [vmem:[#allocation5 + $0xc] sm:$0xf]
    %v47 = vld [vmem:[%s2] sm:$0x1]
    %v49 = vlaneseq
    %v50 = vshrl.u32 %v49, 7
    %v51 = vsub.s32 0, %v50
    %v52 = vrot.slane %v47, %v51
    %v58 = vunpack.c.l.b16 %v43
    %v59 = vunpack.c.l.b16 %v44
    %v60 = vunpack.c.l.b16 %v45
    %v61 = vunpack.c.l.b16 %v46
    %v62 = vpack.c.b16 %v59, %v58
    %v63 = vpack.c.b16 %v61, %v60
    %vm66 = vcmask 261120
    %v68 = vsel %vm66, %v42, 0
    %70 = vmatprep.subr.bf16.mxu0 0
    %71 = vmatpush1.bf16.msra.mxu0 %v62
    %72 = vmatprep.subr.bf16.mxu0 0
    %73 = vmatpush1.bf16.msra.mxu0 %v63
    %74 = vmatprep.subr.bf16.mxu0 0
    %75 = vmatpush1.bf16.msra.mxu0 0
    %76 = vmatprep.subr.bf16.mxu0 0
    %77 = vmatpush1.bf16.msra.mxu0 0
    %78 = vmatprep.subr.bf16.mxu0 0
    %79 = vmatpush1.bf16.msra.mxu0 0
    %80 = vmatprep.subr.bf16.mxu0 0
    %81 = vmatpush1.bf16.msra.mxu0 0
    %82 = vmatprep.subr.bf16.mxu0 0
    %83 = vmatpush1.bf16.msra.mxu0 0
    %84 = vmatprep.subr.bf16.mxu0 0
    %85 = vmatpush1.bf16.msra.mxu0 0
    %86 = vmatprep.subr.bf16.mxu0 0
    %87 = vmatpush1.bf16.msra.mxu0 0
    %88 = vmatprep.subr.bf16.mxu0 0
    %89 = vmatpush1.bf16.msra.mxu0 0
    %90 = vmatprep.subr.bf16.mxu0 0
    %91 = vmatpush1.bf16.msra.mxu0 0
    %92 = vmatprep.subr.bf16.mxu0 0
    %93 = vmatpush1.bf16.msra.mxu0 0
    %94 = vmatprep.subr.bf16.mxu0 0
    %95 = vmatpush1.bf16.msra.mxu0 0
    %96 = vmatprep.subr.bf16.mxu0 0
    %97 = vmatpush1.bf16.msra.mxu0 0
    %98 = vmatprep.subr.bf16.mxu0 0
    %99 = vmatpush1.bf16.msra.mxu0 0
    %100 = vmatprep.subr.bf16.mxu0 0
    %101 = vmatpush1.bf16.msra.mxu0 0
    %102 = vmatprep.mubr.bf16.mxu0 0
    %103 = vmatmul.mubr.bf16.gmra.mrb[0].mxu0 %v68
    %v104 = vpop.f32.mrb[0].mxu0
    %v105 = vadd.f32 %v52, %v104
    %v106 = vpop.f32.mrb[0].mxu0
    %v107 = vpop.f32.mrb[0].mxu0
    %v108 = vpop.f32.mrb[0].mxu0
    %109 = vdwg.mxu0
    %110 = vst [vmem:[#allocation7] sm:$0xff] %v105
    // Predicated region
    $region22: #{tpu_custom_call.1} parent=1 // pred_check
      _
    $region23: #{tpu_custom_call.1} parent=1 // pred_check_branch
      %112 = sbr.rel (0) target = $region25
    $region24: #{tpu_custom_call.1} parent=1 // pred_region
      %s114 = ssub.s32 128, 128
      %115 = vsyncadd [#allocation4], %s114
      %s117 = sshll.u32 [#allocation7], 4
      %s118 = int_to_ptr.vmem [resolvable:$true] %s117
      %120 = dma.vmem_to_hbm [thread:$0]  %s118, 128, %s3, [#allocation4]
    $region25: #{tpu_custom_call.1} parent=1 // pred_fallthru
      _
    // Predicated region
    $region26: #{tpu_custom_call.1} parent=1 // pred_check
      _
    $region27: #{tpu_custom_call.1} parent=1 // pred_check_branch
      %122 = sbr.rel (0) target = $region29
    $region28: #{tpu_custom_call.1} parent=1 // pred_region
      %123 = dma.done [#allocation4], 128
    $region29: #{tpu_custom_call.1} parent=1 // pred_fallthru
      _
    %124 = vsyncpa [#allocation3], 1
    %125 = vsyncpa [#allocation6], 1
    %126 = vsyncpa [#allocation4], 1

</llo_original>
